<compile_context>
chip_gen: v7x
topology: tpu7x:2x2x1
jax: 0.10.0
libtpu: 0.0.40
codegen_flags: <defaults>
</compile_context>

<pallas_src>
import jax
import jax.numpy as jnp
from jax.experimental import pallas as pl
from jax.experimental.pallas import tpu as pltpu


def _round_up(x, m):
    return (x + m - 1) // m * m


def ffn_kernel(x_ref, w1_ref, b1_ref, w2_ref, b2_ref, o_ref):
    # x_ref: (tm, d_in) bf16      w1_ref: (d_in, hidden) bf16   b1_ref: (1, hidden) f32
    # w2_ref: (hidden, d_out) bf16   b2_ref: (1, d_out) f32     o_ref: (tm, d_out)
    h = jnp.dot(x_ref[...], w1_ref[...], preferred_element_type=jnp.float32)
    h = jnp.maximum(h + b1_ref[...], 0.0)                 # bias + ReLU in f32 (VPU)
    y = jnp.dot(h.astype(w2_ref.dtype), w2_ref[...],
                preferred_element_type=jnp.float32)
    o_ref[...] = (y + b2_ref[...]).astype(o_ref.dtype)


def position_wise_ffn(x, w1, b1, w2, b2, *, tm=512, compute_dtype=jnp.bfloat16):
    """x: (batch, seq, d_in); w1: (d_in, hidden); b1: (hidden,);
    w2: (hidden, d_out); b2: (d_out,). Returns (batch, seq, d_out) in x.dtype."""
    batch, seq, d_in = x.shape
    hidden = w1.shape[1]
    d_out = w2.shape[1]
    M = batch * seq

    # --- tiling / padding --------------------------------------------------
    tm_eff = min(tm, _round_up(M, 8))          # big row tile, clamped for tiny inputs
    M_pad = _round_up(M, tm_eff)               # pad tokens so the grid divides evenly
    d_in_p = _round_up(d_in, 128)              # lane-dense feature dims
    hid_p = _round_up(hidden, 128)
    d_out_p = _round_up(d_out, 128)

    out_dtype = x.dtype

    x2d = jnp.pad(x.reshape(M, d_in).astype(compute_dtype),
                  ((0, M_pad - M), (0, d_in_p - d_in)))
    w1_p = jnp.pad(w1.astype(compute_dtype),
                   ((0, d_in_p - d_in), (0, hid_p - hidden)))
    w2_p = jnp.pad(w2.astype(compute_dtype),
                   ((0, hid_p - hidden), (0, d_out_p - d_out)))
    b1_p = jnp.pad(b1.astype(jnp.float32), (0, hid_p - hidden)).reshape(1, hid_p)
    b2_p = jnp.pad(b2.astype(jnp.float32), (0, d_out_p - d_out)).reshape(1, d_out_p)

    grid = (M_pad // tm_eff,)

    flops = 2 * M_pad * (d_in_p * hid_p + hid_p * d_out_p)
    bytes_accessed = (x2d.size * x2d.dtype.itemsize
                      + w1_p.size * w1_p.dtype.itemsize
                      + w2_p.size * w2_p.dtype.itemsize
                      + (b1_p.size + b2_p.size) * 4
                      + M_pad * d_out_p * jnp.dtype(out_dtype).itemsize)

    out2d = pl.pallas_call(
        ffn_kernel,
        out_shape=jax.ShapeDtypeStruct((M_pad, d_out_p), out_dtype),
        grid_spec=pltpu.PrefetchScalarGridSpec(
            num_scalar_prefetch=0,
            grid=grid,
            in_specs=[
                pl.BlockSpec((tm_eff, d_in_p), lambda i: (i, 0)),   # x rows tiled
                pl.BlockSpec((d_in_p, hid_p), lambda i: (0, 0)),    # full W1 (resident)
                pl.BlockSpec((1, hid_p), lambda i: (0, 0)),         # b1
                pl.BlockSpec((hid_p, d_out_p), lambda i: (0, 0)),   # full W2 (resident)
                pl.BlockSpec((1, d_out_p), lambda i: (0, 0)),       # b2
            ],
            out_specs=pl.BlockSpec((tm_eff, d_out_p), lambda i: (i, 0)),
        ),
        compiler_params=pltpu.CompilerParams(
            dimension_semantics=("parallel",),    # token tiles shard across TCs (v7x)
            vmem_limit_bytes=64 * 1024 * 1024,
        ),
        cost_estimate=pl.CostEstimate(
            flops=flops, transcendentals=0, bytes_accessed=bytes_accessed),
    )(x2d, w1_p, b1_p, w2_p, b2_p)

    return out2d[:M, :d_out].reshape(batch, seq, d_out)


def reference_ffn_matched(x, w1, b1, w2, b2):
    """Matched-precision reference: bf16 operands, f32 accumulation (same as kernel)."""
    xb = x.astype(jnp.bfloat16)
    h = jnp.einsum("bsd,dh->bsh", xb, w1.astype(jnp.bfloat16),
                   preferred_element_type=jnp.float32) + b1
    h = jnp.maximum(h, 0.0)
    y = jnp.einsum("bsh,ho->bso", h.astype(jnp.bfloat16), w2.astype(jnp.bfloat16),
                   preferred_element_type=jnp.float32) + b2
    return y.astype(x.dtype)


if __name__ == "__main__":
    # Small shapes consistent with the module's forward:
    batch, seq, d_in = 2, 8, 16
    ffn_num_hiddens, ffn_num_outputs = 32, 16

    key = jax.random.PRNGKey(0)
    kx, k1, kb1, k2, kb2 = jax.random.split(key, 5)

    x = jax.random.normal(kx, (batch, seq, d_in), dtype=jnp.float32)

    # Deterministic init mirroring nn.Linear's uniform(-1/sqrt(fan_in), 1/sqrt(fan_in)).
    lim1 = 1.0 / float(jnp.sqrt(jnp.float32(d_in)))
    w1 = jax.random.uniform(k1, (d_in, ffn_num_hiddens), jnp.float32, -lim1, lim1)
    b1 = jax.random.uniform(kb1, (ffn_num_hiddens,), jnp.float32, -lim1, lim1)
    lim2 = 1.0 / float(jnp.sqrt(jnp.float32(ffn_num_hiddens)))
    w2 = jax.random.uniform(k2, (ffn_num_hiddens, ffn_num_outputs), jnp.float32, -lim2, lim2)
    b2 = jax.random.uniform(kb2, (ffn_num_outputs,), jnp.float32, -lim2, lim2)

    out = position_wise_ffn(x, w1, b1, w2, b2)
    out = jax.block_until_ready(out)

    ref = reference_ffn_matched(x, w1, b1, w2, b2)
    assert out.shape == (batch, seq, ffn_num_outputs)
    assert jnp.allclose(out, ref, atol=2e-3, rtol=2e-3), float(jnp.max(jnp.abs(out - ref)))

    print("KERNEL_OK")
</pallas_src>

<mosaic_0001>
module attributes {stable_mosaic.version = 11 : i64} {
  func.func @ffn_kernel(%arg0: i32, %arg1: memref<16x128xbf16, #tpu.memory_space<vmem>>, %arg2: memref<128x128xbf16, #tpu.memory_space<vmem>>, %arg3: memref<1x128xf32, #tpu.memory_space<vmem>>, %arg4: memref<128x128xbf16, #tpu.memory_space<vmem>>, %arg5: memref<1x128xf32, #tpu.memory_space<vmem>>, %arg6: memref<16x128xf32, #tpu.memory_space<vmem>>) attributes {dimension_semantics = [#tpu.dimension_semantics<parallel>], iteration_bounds = array<i64: 1>, scalar_prefetch = 0 : i64, scratch_operands = 0 : i64, tpu.core_type = #tpu.core_type<tc>, window_params = [{transform_indices = @transform_0, window_bounds = array<i64: 16, 128>}, {pipeline_mode = #tpu.pipeline_mode<synchronous>, transform_indices = @transform_1, window_bounds = array<i64: 128, 128>}, {pipeline_mode = #tpu.pipeline_mode<synchronous>, transform_indices = @transform_2, window_bounds = array<i64: 1, 128>}, {pipeline_mode = #tpu.pipeline_mode<synchronous>, transform_indices = @transform_3, window_bounds = array<i64: 128, 128>}, {pipeline_mode = #tpu.pipeline_mode<synchronous>, transform_indices = @transform_4, window_bounds = array<i64: 1, 128>}, {transform_indices = @transform_5, window_bounds = array<i64: 16, 128>}]} {
    %c0 = arith.constant 0 : index
    %c0_0 = arith.constant 0 : index
    %0 = vector.load %arg1[%c0, %c0_0] : memref<16x128xbf16, #tpu.memory_space<vmem>>, vector<16x128xbf16>
    %c0_1 = arith.constant 0 : index
    %c0_2 = arith.constant 0 : index
    %1 = vector.load %arg2[%c0_1, %c0_2] : memref<128x128xbf16, #tpu.memory_space<vmem>>, vector<128x128xbf16>
    %cst = arith.constant dense<0.000000e+00> : vector<16x128xf32>
    %2 = tpu.matmul %0, %1, %cst {dimension_numbers = #tpu.dot_dimension_numbers<[1], [0], [0], [1], [0, 0, 1, 1], [], []>} : vector<16x128xbf16>, vector<128x128xbf16>, vector<16x128xf32> -> vector<16x128xf32>
    %c0_3 = arith.constant 0 : index
    %c0_4 = arith.constant 0 : index
    %3 = vector.load %arg3[%c0_3, %c0_4] : memref<1x128xf32, #tpu.memory_space<vmem>>, vector<1x128xf32>
    %4 = vector.broadcast %3 : vector<1x128xf32> to vector<16x128xf32>
    %5 = arith.addf %2, %4 : vector<16x128xf32>
    %cst_5 = arith.constant 0.000000e+00 : f32
    %6 = vector.broadcast %cst_5 : f32 to vector<16x128xf32>
    %7 = arith.maximumf %5, %6 : vector<16x128xf32>
    %8 = arith.truncf %7 : vector<16x128xf32> to vector<16x128xbf16>
    %c0_6 = arith.constant 0 : index
    %c0_7 = arith.constant 0 : index
    %9 = vector.load %arg4[%c0_6, %c0_7] : memref<128x128xbf16, #tpu.memory_space<vmem>>, vector<128x128xbf16>
    %cst_8 = arith.constant dense<0.000000e+00> : vector<16x128xf32>
    %10 = tpu.matmul %8, %9, %cst_8 {dimension_numbers = #tpu.dot_dimension_numbers<[1], [0], [0], [1], [0, 0, 1, 1], [], []>} : vector<16x128xbf16>, vector<128x128xbf16>, vector<16x128xf32> -> vector<16x128xf32>
    %c0_9 = arith.constant 0 : index
    %c0_10 = arith.constant 0 : index
    %11 = vector.load %arg5[%c0_9, %c0_10] : memref<1x128xf32, #tpu.memory_space<vmem>>, vector<1x128xf32>
    %12 = vector.broadcast %11 : vector<1x128xf32> to vector<16x128xf32>
    %13 = arith.addf %10, %12 : vector<16x128xf32>
    %c0_11 = arith.constant 0 : index
    %c0_12 = arith.constant 0 : index
    %14 = vector.load %arg6[%c0_11, %c0_12] : memref<16x128xf32, #tpu.memory_space<vmem>>, vector<16x128xf32>
    tpu.vector_store %arg6[%c0_11, %c0_12], %13 {strides = array<i32>} : memref<16x128xf32, #tpu.memory_space<vmem>>, vector<16x128xf32>,
    return
  }
  func.func @transform_0(%arg0: i32) -> (i32, i32) {
    %c0_i32 = arith.constant 0 : i32
    %c0_i32_0 = arith.constant 0 : i32
    return %arg0, %c0_i32 : i32, i32
  }
  func.func @transform_1(%arg0: i32) -> (i32, i32) {
    %c0_i32 = arith.constant 0 : i32
    %c0_i32_0 = arith.constant 0 : i32
    %c0_i32_1 = arith.constant 0 : i32
    return %c0_i32, %c0_i32_0 : i32, i32
  }
  func.func @transform_2(%arg0: i32) -> (i32, i32) {
    %c0_i32 = arith.constant 0 : i32
    %c0_i32_0 = arith.constant 0 : i32
    %c0_i32_1 = arith.constant 0 : i32
    return %c0_i32, %c0_i32_0 : i32, i32
  }
  func.func @transform_3(%arg0: i32) -> (i32, i32) {
    %c0_i32 = arith.constant 0 : i32
    %c0_i32_0 = arith.constant 0 : i32
    %c0_i32_1 = arith.constant 0 : i32
    return %c0_i32, %c0_i32_0 : i32, i32
  }
  func.func @transform_4(%arg0: i32) -> (i32, i32) {
    %c0_i32 = arith.constant 0 : i32
    %c0_i32_0 = arith.constant 0 : i32
    %c0_i32_1 = arith.constant 0 : i32
    return %c0_i32, %c0_i32_0 : i32, i32
  }
  func.func @transform_5(%arg0: i32) -> (i32, i32) {
    %c0_i32 = arith.constant 0 : i32
    %c0_i32_0 = arith.constant 0 : i32
    return %arg0, %c0_i32 : i32, i32
  }
}

</mosaic_0001>

<llo_original>
// kernel: tpu_custom_call.1
$region0: #{tpu_custom_call.1}
  #allocation0 [shape = 'u32[]', space=smem, size = 0x4, offset = 0x4, fixed_abs, tag = 'smem constant byte address 0x4 - core index']
  #allocation1 [shape = 'u32[144,128]{1,0:T(1,128)}', space=vmem, size = 0x12000, scoped, tag = 'internal scratch']
  %s0 = inlined_call_operand.hbm [shape: bf16[16,128], index: 0, kind: input, shape index: {}]
  %s1 = inlined_call_operand.hbm [shape: bf16[128,128], index: 1, kind: input, shape index: {}]
  %s2 = inlined_call_operand.hbm [shape: f32[1,128], index: 2, kind: input, shape index: {}]
  %s3 = inlined_call_operand.hbm [shape: bf16[128,128], index: 3, kind: input, shape index: {}]
  %s4 = inlined_call_operand.hbm [shape: f32[1,128], index: 4, kind: input, shape index: {}]
  %s5 = inlined_call_operand.hbm [shape: f32[16,128], index: 5, kind: output, shape index: {}]
  %s6 = sld [smem:[#allocation0]]
  $region50: #{tpu_custom_call.1} parent=0
    _
  %s8 = ssub.s32 1, %s6
  %s9 = scalar_select 0, %s8, %s6
  $region1: #{tpu_custom_call.1} parent=0
    #allocation2 [shape = 'u8[4096]{0}', space=vmem, size = 0x1000, scoped, tag = 'input window, operand 0, single buffered']
    #allocation3 [shape = 's32[1]{0}', space=sflag, size = 0x4, scoped, tag = 'scoped memory for tpu_custom_call.1']
    #allocation4 [shape = 's32[1]{0}', space=sflag, size = 0x4, scoped, tag = 'scoped memory for tpu_custom_call.1']
    #allocation5 [shape = 'u8[32768]{0}', space=vmem, size = 0x8000, scoped, tag = 'input window, operand 1, single buffered']
    #allocation6 [shape = 's32[1]{0}', space=sflag, size = 0x4, scoped, tag = 'scoped memory for tpu_custom_call.1']
    #allocation7 [shape = 'u8[512]{0}', space=vmem, size = 0x400, scoped, tag = 'input window, operand 2, single buffered']
    #allocation8 [shape = 'u8[32768]{0}', space=vmem, size = 0x8000, scoped, tag = 'input window, operand 3, single buffered']
    #allocation9 [shape = 's32[1]{0}', space=sflag, size = 0x4, scoped, tag = 'scoped memory for tpu_custom_call.1']
    #allocation10 [shape = 'u8[512]{0}', space=vmem, size = 0x400, scoped, tag = 'input window, operand 4, single buffered']
    #allocation11 [shape = 'u8[8192]{0}', space=vmem, size = 0x2000, scoped, tag = 'output window, operand 0, single buffered']
    %10 = vsyncpa [#allocation3], 0
    %11 = vsyncpa [#allocation6], 0
    %12 = vsyncpa [#allocation9], 0
    %13 = vsyncpa [#allocation4], 0
    // Predicated region
    $region2: #{tpu_custom_call.1} parent=1 // pred_check
      _
    $region3: #{tpu_custom_call.1} parent=1 // pred_check_branch
      %15 = sbr.rel (0) target = $region5
    $region4: #{tpu_custom_call.1} parent=1 // pred_region
      %s17 = ssub.s32 128, 128
      %18 = vsyncadd [#allocation3], %s17
      %s19 = sshll.u32 [#allocation2], 4
      %s20 = int_to_ptr.vmem [resolvable:$true] %s19
      %25 = dma.hbm_to_vmem [thread:$0]  %s0, 128, %s20, [#allocation3], 64, 64, 4
    $region5: #{tpu_custom_call.1} parent=1 // pred_fallthru
      _
    // Predicated region
    $region6: #{tpu_custom_call.1} parent=1 // pred_check
      _
    $region7: #{tpu_custom_call.1} parent=1 // pred_check_branch
      %27 = sbr.rel (0) target = $region9
    $region8: #{tpu_custom_call.1} parent=1 // pred_region
      %s29 = ssub.s32 1024, 1024
      %30 = vsyncadd [#allocation6], %s29
      %s31 = sshll.u32 [#allocation5], 4
      %s32 = int_to_ptr.vmem [resolvable:$true] %s31
      %37 = dma.hbm_to_vmem [thread:$0]  %s1, 1024, %s32, [#allocation6], 64, 64, 4
    $region9: #{tpu_custom_call.1} parent=1 // pred_fallthru
      _
    // Predicated region
    $region10: #{tpu_custom_call.1} parent=1 // pred_check
      _
    $region11: #{tpu_custom_call.1} parent=1 // pred_check_branch
      %39 = sbr.rel (0) target = $region13
    $region12: #{tpu_custom_call.1} parent=1 // pred_region
      %s41 = ssub.s32 16, 16
      %42 = vsyncadd [#allocation6], %s41
      %s44 = sshll.u32 [#allocation7], 4
      %s45 = int_to_ptr.vmem [resolvable:$true] %s44
      %47 = dma.hbm_to_vmem [thread:$0]  %s2, 16, %s45, [#allocation6]
    $region13: #{tpu_custom_call.1} parent=1 // pred_fallthru
      _
    // Predicated region
    $region14: #{tpu_custom_call.1} parent=1 // pred_check
      _
    $region15: #{tpu_custom_call.1} parent=1 // pred_check_branch
      %49 = sbr.rel (0) target = $region17
    $region16: #{tpu_custom_call.1} parent=1 // pred_region
      %s51 = ssub.s32 1024, 1024
      %52 = vsyncadd [#allocation9], %s51
      %s53 = sshll.u32 [#allocation8], 4
      %s54 = int_to_ptr.vmem [resolvable:$true] %s53
      %59 = dma.hbm_to_vmem [thread:$0]  %s3, 1024, %s54, [#allocation9], 64, 64, 4
    $region17: #{tpu_custom_call.1} parent=1 // pred_fallthru
      _
    // Predicated region
    $region18: #{tpu_custom_call.1} parent=1 // pred_check
      _
    $region19: #{tpu_custom_call.1} parent=1 // pred_check_branch
      %61 = sbr.rel (0) target = $region21
    $region20: #{tpu_custom_call.1} parent=1 // pred_region
      %s63 = ssub.s32 16, 16
      %64 = vsyncadd [#allocation9], %s63
      %s66 = sshll.u32 [#allocation10], 4
      %s67 = int_to_ptr.vmem [resolvable:$true] %s66
      %69 = dma.hbm_to_vmem [thread:$0]  %s4, 16, %s67, [#allocation9]
    $region21: #{tpu_custom_call.1} parent=1 // pred_fallthru
      _
    // Predicated region
    $region22: #{tpu_custom_call.1} parent=1 // pred_check
      _
    $region23: #{tpu_custom_call.1} parent=1 // pred_check_branch
      %71 = sbr.rel (0) target = $region25
    $region24: #{tpu_custom_call.1} parent=1 // pred_region
      %72 = dma.done [#allocation3], 128
    $region25: #{tpu_custom_call.1} parent=1 // pred_fallthru
      _
    // Predicated region
    $region26: #{tpu_custom_call.1} parent=1 // pred_check
      _
    $region27: #{tpu_custom_call.1} parent=1 // pred_check_branch
      %74 = sbr.rel (0) target = $region29
    $region28: #{tpu_custom_call.1} parent=1 // pred_region
      %75 = dma.done [#allocation6], 1024
    $region29: #{tpu_custom_call.1} parent=1 // pred_fallthru
      _
    // Predicated region
    $region30: #{tpu_custom_call.1} parent=1 // pred_check
      _
    $region31: #{tpu_custom_call.1} parent=1 // pred_check_branch
      %77 = sbr.rel (0) target = $region33
    $region32: #{tpu_custom_call.1} parent=1 // pred_region
      %78 = dma.done [#allocation6], 16
    $region33: #{tpu_custom_call.1} parent=1 // pred_fallthru
      _
    // Predicated region
    $region34: #{tpu_custom_call.1} parent=1 // pred_check
      _
    $region35: #{tpu_custom_call.1} parent=1 // pred_check_branch
      %80 = sbr.rel (0) target = $region37
    $region36: #{tpu_custom_call.1} parent=1 // pred_region
      %81 = dma.done [#allocation9], 1024
    $region37: #{tpu_custom_call.1} parent=1 // pred_fallthru
      _
    // Predicated region
    $region38: #{tpu_custom_call.1} parent=1 // pred_check
      _
    $region39: #{tpu_custom_call.1} parent=1 // pred_check_branch
      %83 = sbr.rel (0) target = $region41
    $region40: #{tpu_custom_call.1} parent=1 // pred_region
      %84 = dma.done [#allocation9], 16
    $region41: #{tpu_custom_call.1} parent=1 // pred_fallthru
      _
    %v86 = vld [vmem:[#allocation2] sm:$0xf]
    %v87 = vld [vmem:[#allocation2 + $0x4] sm:$0xf]
    %v88 = vld [vmem:[#allocation5] sm:$0xf]
    %v89 = vld [vmem:[#allocation5 + $0x4] sm:$0xf]
    %v90 = vld [vmem:[#allocation5 + $0x8] sm:$0xf]
    %v91 = vld [vmem:[#allocation5 + $0xc] sm:$0xf]
    %v92 = vld [vmem:[#allocation5 + $0x10] sm:$0xf]
    %v93 = vld [vmem:[#allocation5 + $0x14] sm:$0xf]
    %v94 = vld [vmem:[#allocation5 + $0x18] sm:$0xf]
    %v95 = vld [vmem:[#allocation5 + $0x1c] sm:$0xf]
    %v96 = vld [vmem:[#allocation5 + $0x20] sm:$0xf]
    %v97 = vld [vmem:[#allocation5 + $0x24] sm:$0xf]
    %v98 = vld [vmem:[#allocation5 + $0x28] sm:$0xf]
    %v99 = vld [vmem:[#allocation5 + $0x2c] sm:$0xf]
    %v100 = vld [vmem:[#allocation5 + $0x30] sm:$0xf]
    %v101 = vld [vmem:[#allocation5 + $0x34] sm:$0xf]
    %v102 = vld [vmem:[#allocation5 + $0x38] sm:$0xf]
    %v103 = vld [vmem:[#allocation5 + $0x3c] sm:$0xf]
    %v104 = vld [vmem:[#allocation7] sm:$0x1]
    %v106 = vlaneseq
    %v107 = vshrl.u32 %v106, 7
    %v108 = vsub.s32 0, %v107
    %v109 = vrot.slane %v104, %v108
    %v113 = vunpack.c.l.b16 %v86
    %v114 = vunpack.c.l.b16 %v87
    %v115 = vpack.c.b16 %v114, %v113
    %v133 = vunpack.c.l.b16 %v88
    %v134 = vunpack.c.l.b16 %v89
    %v135 = vunpack.c.l.b16 %v90
    %v136 = vunpack.c.l.b16 %v91
    %v137 = vunpack.c.l.b16 %v92
    %v138 = vunpack.c.l.b16 %v93
    %v139 = vunpack.c.l.b16 %v94
    %v140 = vunpack.c.l.b16 %v95
    %v141 = vunpack.c.l.b16 %v96
    %v142 = vunpack.c.l.b16 %v97
    %v143 = vunpack.c.l.b16 %v98
    %v144 = vunpack.c.l.b16 %v99
    %v145 = vunpack.c.l.b16 %v100
    %v146 = vunpack.c.l.b16 %v101
    %v147 = vunpack.c.l.b16 %v102
    %v148 = vunpack.c.l.b16 %v103
    %v149 = vpack.c.b16 %v134, %v133
    %v150 = vpack.c.b16 %v136, %v135
    %v151 = vpack.c.b16 %v138, %v137
    %v152 = vpack.c.b16 %v140, %v139
    %v153 = vpack.c.b16 %v142, %v141
    %v154 = vpack.c.b16 %v144, %v143
    %v155 = vpack.c.b16 %v146, %v145
    %v156 = vpack.c.b16 %v148, %v147
    %165 = vmatprep.subr.bf16.mxu0 0
    %166 = vmatpush1.bf16.msra.mxu0 %v149
    %167 = vmatprep.subr.bf16.mxu0 0
    %168 = vmatpush1.bf16.msra.mxu0 %v150
    %169 = vmatprep.subr.bf16.mxu0 0
    %170 = vmatpush1.bf16.msra.mxu0 %v151
    %171 = vmatprep.subr.bf16.mxu0 0
    %172 = vmatpush1.bf16.msra.mxu0 %v152
    %173 = vmatprep.subr.bf16.mxu0 0
    %174 = vmatpush1.bf16.msra.mxu0 %v153
    %175 = vmatprep.subr.bf16.mxu0 0
    %176 = vmatpush1.bf16.msra.mxu0 %v154
    %177 = vmatprep.subr.bf16.mxu0 0
    %178 = vmatpush1.bf16.msra.mxu0 %v155
    %179 = vmatprep.subr.bf16.mxu0 0
    %180 = vmatpush1.bf16.msra.mxu0 %v156
    %181 = vmatprep.subr.bf16.mxu0 0
    %182 = vmatpush1.bf16.msra.mxu0 0
    %183 = vmatprep.subr.bf16.mxu0 0
    %184 = vmatpush1.bf16.msra.mxu0 0
    %185 = vmatprep.subr.bf16.mxu0 0
    %186 = vmatpush1.bf16.msra.mxu0 0
    %187 = vmatprep.subr.bf16.mxu0 0
    %188 = vmatpush1.bf16.msra.mxu0 0
    %189 = vmatprep.subr.bf16.mxu0 0
    %190 = vmatpush1.bf16.msra.mxu0 0
    %191 = vmatprep.subr.bf16.mxu0 0
    %192 = vmatpush1.bf16.msra.mxu0 0
    %193 = vmatprep.subr.bf16.mxu0 0
    %194 = vmatpush1.bf16.msra.mxu0 0
    %195 = vmatprep.subr.bf16.mxu0 0
    %196 = vmatpush1.bf16.msra.mxu0 0
    %197 = vmatprep.mubr.bf16.mxu0 0
    %198 = vmatmul.mubr.bf16.gmra.mrb[0].mxu0 %v115
    %v199 = vpop.f32.mrb[0].mxu0
    %v200 = vadd.f32 %v109, %v199
    %v201 = vpop.f32.mrb[0].mxu0
    %v202 = vpop.f32.mrb[0].mxu0
    %v203 = vadd.f32 %v109, %v202
    %v204 = vpop.f32.mrb[0].mxu0
    %205 = vdwg.mxu0
    %v206 = vmax.f32 %v200, 0.0
    %v207 = vmax.f32 %v203, 0.0
    %v208 = vpack.c.bf16 %v207, %v206
    %v209 = vld [vmem:[#allocation8] sm:$0xf]
    %v210 = vld [vmem:[#allocation8 + $0x4] sm:$0xf]
    %v211 = vld [vmem:[#allocation8 + $0x8] sm:$0xf]
    %v212 = vld [vmem:[#allocation8 + $0xc] sm:$0xf]
    %v213 = vld [vmem:[#allocation8 + $0x10] sm:$0xf]
    %v214 = vld [vmem:[#allocation8 + $0x14] sm:$0xf]
    %v215 = vld [vmem:[#allocation8 + $0x18] sm:$0xf]
    %v216 = vld [vmem:[#allocation8 + $0x1c] sm:$0xf]
    %v217 = vld [vmem:[#allocation8 + $0x20] sm:$0xf]
    %v218 = vld [vmem:[#allocation8 + $0x24] sm:$0xf]
    %v219 = vld [vmem:[#allocation8 + $0x28] sm:$0xf]
    %v220 = vld [vmem:[#allocation8 + $0x2c] sm:$0xf]
    %v221 = vld [vmem:[#allocation8 + $0x30] sm:$0xf]
    %v222 = vld [vmem:[#allocation8 + $0x34] sm:$0xf]
    %v223 = vld [vmem:[#allocation8 + $0x38] sm:$0xf]
    %v224 = vld [vmem:[#allocation8 + $0x3c] sm:$0xf]
    %v225 = vld [vmem:[#allocation10] sm:$0x1]
    %v227 = vlaneseq
    %v228 = vshrl.u32 %v227, 7
    %v229 = vsub.s32 0, %v228
    %v230 = vrot.slane %v225, %v229
    %v248 = vunpack.c.l.b16 %v209
    %v249 = vunpack.c.l.b16 %v210
    %v250 = vunpack.c.l.b16 %v211
    %v251 = vunpack.c.l.b16 %v212
    %v252 = vunpack.c.l.b16 %v213
    %v253 = vunpack.c.l.b16 %v214
    %v254 = vunpack.c.l.b16 %v215
    %v255 = vunpack.c.l.b16 %v216
    %v256 = vunpack.c.l.b16 %v217
    %v257 = vunpack.c.l.b16 %v218
    %v258 = vunpack.c.l.b16 %v219
    %v259 = vunpack.c.l.b16 %v220
    %v260 = vunpack.c.l.b16 %v221
    %v261 = vunpack.c.l.b16 %v222
    %v262 = vunpack.c.l.b16 %v223
    %v263 = vunpack.c.l.b16 %v224
    %v264 = vpack.c.b16 %v249, %v248
    %v265 = vpack.c.b16 %v251, %v250
    %v266 = vpack.c.b16 %v253, %v252
    %v267 = vpack.c.b16 %v255, %v254
    %v268 = vpack.c.b16 %v257, %v256
    %v269 = vpack.c.b16 %v259, %v258
    %v270 = vpack.c.b16 %v261, %v260
    %v271 = vpack.c.b16 %v263, %v262
    %280 = vmatprep.subr.bf16.mxu0 0
    %281 = vmatpush1.bf16.msra.mxu0 %v264
    %282 = vmatprep.subr.bf16.mxu0 0
    %283 = vmatpush1.bf16.msra.mxu0 %v265
    %284 = vmatprep.subr.bf16.mxu0 0
    %285 = vmatpush1.bf16.msra.mxu0 %v266
    %286 = vmatprep.subr.bf16.mxu0 0
    %287 = vmatpush1.bf16.msra.mxu0 %v267
    %288 = vmatprep.subr.bf16.mxu0 0
    %289 = vmatpush1.bf16.msra.mxu0 %v268
    %290 = vmatprep.subr.bf16.mxu0 0
    %291 = vmatpush1.bf16.msra.mxu0 %v269
    %292 = vmatprep.subr.bf16.mxu0 0
    %293 = vmatpush1.bf16.msra.mxu0 %v270
    %294 = vmatprep.subr.bf16.mxu0 0
    %295 = vmatpush1.bf16.msra.mxu0 %v271
    %296 = vmatprep.subr.bf16.mxu0 0
    %297 = vmatpush1.bf16.msra.mxu0 0
    %298 = vmatprep.subr.bf16.mxu0 0
    %299 = vmatpush1.bf16.msra.mxu0 0
    %300 = vmatprep.subr.bf16.mxu0 0
    %301 = vmatpush1.bf16.msra.mxu0 0
    %302 = vmatprep.subr.bf16.mxu0 0
    %303 = vmatpush1.bf16.msra.mxu0 0
    %304 = vmatprep.subr.bf16.mxu0 0
    %305 = vmatpush1.bf16.msra.mxu0 0
    %306 = vmatprep.subr.bf16.mxu0 0
    %307 = vmatpush1.bf16.msra.mxu0 0
    %308 = vmatprep.subr.bf16.mxu0 0
    %309 = vmatpush1.bf16.msra.mxu0 0
    %310 = vmatprep.subr.bf16.mxu0 0
    %311 = vmatpush1.bf16.msra.mxu0 0
    %312 = vmatprep.mubr.bf16.mxu0 0
    %313 = vmatmul.mubr.bf16.gmra.mrb[0].mxu0 %v208
    %v314 = vpop.f32.mrb[0].mxu0
    %v315 = vadd.f32 %v230, %v314
    %v316 = vpop.f32.mrb[0].mxu0
    %v317 = vpop.f32.mrb[0].mxu0
    %v318 = vadd.f32 %v230, %v317
    %v319 = vpop.f32.mrb[0].mxu0
    %320 = vdwg.mxu0
    %321 = vst [vmem:[#allocation11] sm:$0xff] %v315
    %322 = vst [vmem:[#allocation11 + $0x8] sm:$0xff] %v318
    // Predicated region
    $region42: #{tpu_custom_call.1} parent=1 // pred_check
      _
    $region43: #{tpu_custom_call.1} parent=1 // pred_check_branch
      %324 = sbr.rel (0) target = $region45
    $region44: #{tpu_custom_call.1} parent=1 // pred_region
      %s326 = ssub.s32 256, 256
      %327 = vsyncadd [#allocation4], %s326
      %s328 = sshll.u32 [#allocation11], 4
      %s329 = int_to_ptr.vmem [resolvable:$true] %s328
      %334 = dma.vmem_to_hbm [thread:$0]  %s329, 256, %s5, [#allocation4], 128, 128, 8
    $region45: #{tpu_custom_call.1} parent=1 // pred_fallthru
      _
    // Predicated region
    $region46: #{tpu_custom_call.1} parent=1 // pred_check
      _
    $region47: #{tpu_custom_call.1} parent=1 // pred_check_branch
      %336 = sbr.rel (0) target = $region49
    $region48: #{tpu_custom_call.1} parent=1 // pred_region
      %337 = dma.done [#allocation4], 256
    $region49: #{tpu_custom_call.1} parent=1 // pred_fallthru
      _
    %338 = vsyncpa [#allocation3], 1
    %339 = vsyncpa [#allocation6], 1
    %340 = vsyncpa [#allocation9], 1
    %341 = vsyncpa [#allocation4], 1

</llo_original>
